<compile_context>
chip_gen: v7x
topology: tpu7x:2x2x1
jax: 0.10.0
libtpu: 0.0.40
codegen_flags: <defaults>
</compile_context>

<pallas_src>
import numpy as np
import jax
import jax.numpy as jnp
from jax.experimental import pallas as pl
from jax.experimental.pallas import tpu as pltpu

LANE = 128
_VMEM_BUDGET = 20 * 1024 * 1024   # bytes for the streaming x/out VMEM buffers
_VMEM_LIMIT = 32 * 1024 * 1024    # scoped-VMEM limit handed to the compiler
_N_STREAM_BUFS = 5                # x triple-buffered + out double-buffered


def _round_up(v, m):
    return ((v + m - 1) // m) * m


def _make_dyrelu_kernel(k):
    def kernel(x_ref, coef_ref, o_ref):
        # x_ref: (1, C_blk, T) streaming dtype; coef_ref: (1, 2k, C_blk, 1) f32.
        x = x_ref[0].astype(jnp.float32)            # (C_blk, T)
        out = None
        for j in range(k):                          # k is tiny & static (typ. 2)
            a = coef_ref[0, j]                      # (C_blk, 1) per-channel slope
            b = coef_ref[0, k + j]                  # (C_blk, 1) per-channel offset
            val = x * a + b                         # lane-broadcast over (C_blk, T)
            out = val if out is None else jnp.maximum(out, val)
        o_ref[0] = out.astype(o_ref.dtype)
    return kernel


def _pick_tiles(C, HW, itemsize):
    """Pick (C_blk, T) with _N_STREAM_BUFS * C_blk * T * itemsize <= budget."""
    sub_pack = max(1, 4 // itemsize)          # elems per 32-bit sublane slot
    c_align = 8 * sub_pack                    # sublane-dense channel multiple
    max_tile_elems = _VMEM_BUDGET // (_N_STREAM_BUFS * itemsize)

    if C * LANE <= max_tile_elems:
        c_blk = C                             # whole channel dim fits one block
    else:
        c_blk = (max_tile_elems // LANE) // c_align * c_align
        c_blk = max(c_align, min(c_blk, _round_up(C, c_align)))

    if HW <= LANE:
        t = HW                                # lane dim == full array dim (exempt)
    else:
        t_budget = max(LANE, (max_tile_elems // c_blk) // LANE * LANE)
        hw_floor = max(LANE, (HW // LANE) * LANE)
        t = min(t_budget, hw_floor)
    return c_blk, t


def dyrelu_b(x, w1, b1, w2, b2, lambdas, bias_const, k=2):
    B, C, H, W = x.shape
    HW = H * W
    x2 = x.reshape(B, C, HW)                  # free reshape of trailing dims

    # ---- coefficient path (trivial flops) stays in plain JAX ---------------
    pooled = jnp.mean(x2, axis=-1, dtype=jnp.float32)              # (B, C)
    h = jax.nn.relu(pooled @ w1.T + b1)                            # (B, Cr)
    t = jax.nn.sigmoid(h @ w2.T + b2)                              # (B, 2kC)
    t = 2.0 * t - 1.0
    coef = t.reshape(B, C, 2 * k) * lambdas + bias_const           # (B, C, 2k)
    # (B, 2k, C, 1): slicing [0, j] in-kernel gives a (C_blk, 1) column directly,
    # sublane-major, no sublane-boundary slicing and no in-kernel reshapes.
    coef = jnp.transpose(coef, (0, 2, 1))[..., None].astype(jnp.float32)

    # ---- lane-dense streaming VPU pass --------------------------------------
    itemsize = jnp.dtype(x.dtype).itemsize
    C_blk, T = _pick_tiles(C, HW, itemsize)
    grid = (B, pl.cdiv(C, C_blk), pl.cdiv(HW, T))

    x_map = lambda b, c, s: (b, c, s)
    coef_map = lambda b, c, s: (b, 0, c, 0)

    def make_x_spec(buffered):
        if buffered and hasattr(pl, "Buffered"):
            try:
                return pl.BlockSpec((1, C_blk, T), x_map,
                                    pipeline_mode=pl.Buffered(3))
            except TypeError:
                pass
        return pl.BlockSpec((1, C_blk, T), x_map)

    def make_call(dim_semantics, buffered):
        return pl.pallas_call(
            _make_dyrelu_kernel(k),
            out_shape=jax.ShapeDtypeStruct((B, C, HW), x.dtype),
            grid=grid,
            in_specs=[
                make_x_spec(buffered),                             # x tile
                pl.BlockSpec((1, 2 * k, C_blk, 1), coef_map),      # coeffs
            ],
            out_specs=pl.BlockSpec((1, C_blk, T), x_map),
            compiler_params=pltpu.CompilerParams(
                dimension_semantics=dim_semantics,
                vmem_limit_bytes=_VMEM_LIMIT),
        )

    plain = (pltpu.PARALLEL,) * 3
    attempts = []
    if hasattr(pltpu, "CORE_PARALLEL"):
        core_sem = list(plain)
        core_sem[int(np.argmax(grid))] = pltpu.CORE_PARALLEL  # v7x: both TCs
        attempts.append((tuple(core_sem), True))
    attempts.append((plain, True))
    attempts.append((plain, False))

    out, last_err = None, None
    for sem, buffered in attempts:
        try:
            out = jax.block_until_ready(make_call(sem, buffered)(x2, coef))
            break
        except Exception as err:   # fall back to a more conservative config
            last_err = err
    if out is None:
        raise last_err

    return out.reshape(B, C, H, W)


if __name__ == "__main__":
    key = jax.random.PRNGKey(0)
    B, C, H, W = 2, 8, 16, 16
    reduction, k = 4, 2
    Cr = C // reduction

    k1, k2, k3, k4, k5 = jax.random.split(key, 5)
    x = jax.random.normal(k1, (B, C, H, W), dtype=jnp.float32)
    # Deterministic synthetic parameters (shapes from DyReLUB.__init__):
    w1 = jax.random.normal(k2, (Cr, C), dtype=jnp.float32) * 0.3          # Conv2d(C, C//r, 1)
    b1 = jax.random.normal(k3, (Cr,), dtype=jnp.float32) * 0.1
    w2 = jax.random.normal(k4, (2 * k * C, Cr), dtype=jnp.float32) * 0.3  # Conv2d(C//r, 2kC, 1)
    b2 = jax.random.normal(k5, (2 * k * C,), dtype=jnp.float32) * 0.1
    # Registered buffers (fixed values):
    lambdas = jnp.asarray([1.0] * k + [0.5] * k, dtype=jnp.float32)
    bias_const = jnp.asarray([1.0] + [0.0] * (2 * k - 1), dtype=jnp.float32)

    out = jax.block_until_ready(
        dyrelu_b(x, w1, b1, w2, b2, lambdas, bias_const, k=k))

    # Pure-JAX reference mirroring the PyTorch forward exactly.
    pooled = jnp.mean(x, axis=(2, 3))                                   # (B, C)
    h = jax.nn.relu(pooled @ w1.T + b1)                                 # (B, Cr)
    coef = jax.nn.sigmoid(h @ w2.T + b2)                                # (B, 2kC)
    coef = 2.0 * coef - 1.0
    coef = coef.reshape(B, C, 2 * k) * lambdas + bias_const             # (B, C, 2k)
    a, bb = coef[:, :, :k], coef[:, :, k:]
    ref = jnp.max(x[..., None] * a[:, :, None, None, :]
                  + bb[:, :, None, None, :], axis=-1)                   # (B, C, H, W)

    err = float(np.max(np.abs(np.asarray(out) - np.asarray(ref))))
    assert np.allclose(np.asarray(out), np.asarray(ref), atol=1e-4, rtol=1e-4), err
    print("KERNEL_OK")
</pallas_src>

<mosaic_0001>
module attributes {stable_mosaic.version = 11 : i64} {
  func.func @kernel(%arg0: i32, %arg1: i32, %arg2: i32, %arg3: memref<1x8x256xf32, #tpu.memory_space<vmem>>, %arg4: memref<1x4x8x1xf32, #tpu.memory_space<vmem>>, %arg5: memref<1x8x256xf32, #tpu.memory_space<vmem>>) attributes {dimension_semantics = [#tpu.dimension_semantics<parallel>, #tpu.dimension_semantics<parallel>, #tpu.dimension_semantics<parallel>], iteration_bounds = array<i64: 2, 1, 1>, scalar_prefetch = 0 : i64, scratch_operands = 0 : i64, tpu.core_type = #tpu.core_type<tc>, window_params = [{transform_indices = @transform_0, window_bounds = array<i64: 1, 8, 256>}, {transform_indices = @transform_1, window_bounds = array<i64: 1, 4, 8, 1>}, {transform_indices = @transform_2, window_bounds = array<i64: 1, 8, 256>}]} {
    %c0 = arith.constant 0 : index
    %c0_0 = arith.constant 0 : index
    %c0_1 = arith.constant 0 : index
    %0 = vector.load %arg3[%c0, %c0_0, %c0_1] : memref<1x8x256xf32, #tpu.memory_space<vmem>>, vector<1x8x256xf32>
    %1 = vector.shape_cast %0 : vector<1x8x256xf32> to vector<8x256xf32>
    %c0_2 = arith.constant 0 : index
    %c0_3 = arith.constant 0 : index
    %c0_4 = arith.constant 0 : index
    %c0_5 = arith.constant 0 : index
    %2 = vector.load %arg4[%c0_2, %c0_3, %c0_4, %c0_5] : memref<1x4x8x1xf32, #tpu.memory_space<vmem>>, vector<1x1x8x1xf32>
    %3 = vector.shape_cast %2 : vector<1x1x8x1xf32> to vector<8x1xf32>
    %c0_6 = arith.constant 0 : index
    %c2 = arith.constant 2 : index
    %c0_7 = arith.constant 0 : index
    %c0_8 = arith.constant 0 : index
    %4 = vector.load %arg4[%c0_6, %c2, %c0_7, %c0_8] : memref<1x4x8x1xf32, #tpu.memory_space<vmem>>, vector<1x1x8x1xf32>
    %5 = vector.shape_cast %4 : vector<1x1x8x1xf32> to vector<8x1xf32>
    %6 = vector.broadcast %3 : vector<8x1xf32> to vector<8x256xf32>
    %7 = arith.mulf %1, %6 : vector<8x256xf32>
    %8 = vector.broadcast %5 : vector<8x1xf32> to vector<8x256xf32>
    %9 = arith.addf %7, %8 : vector<8x256xf32>
    %c0_9 = arith.constant 0 : index
    %c1 = arith.constant 1 : index
    %c0_10 = arith.constant 0 : index
    %c0_11 = arith.constant 0 : index
    %10 = vector.load %arg4[%c0_9, %c1, %c0_10, %c0_11] : memref<1x4x8x1xf32, #tpu.memory_space<vmem>>, vector<1x1x8x1xf32>
    %11 = vector.shape_cast %10 : vector<1x1x8x1xf32> to vector<8x1xf32>
    %c0_12 = arith.constant 0 : index
    %c3 = arith.constant 3 : index
    %c0_13 = arith.constant 0 : index
    %c0_14 = arith.constant 0 : index
    %12 = vector.load %arg4[%c0_12, %c3, %c0_13, %c0_14] : memref<1x4x8x1xf32, #tpu.memory_space<vmem>>, vector<1x1x8x1xf32>
    %13 = vector.shape_cast %12 : vector<1x1x8x1xf32> to vector<8x1xf32>
    %14 = vector.broadcast %11 : vector<8x1xf32> to vector<8x256xf32>
    %15 = arith.mulf %1, %14 : vector<8x256xf32>
    %16 = vector.broadcast %13 : vector<8x1xf32> to vector<8x256xf32>
    %17 = arith.addf %15, %16 : vector<8x256xf32>
    %18 = arith.maximumf %9, %17 : vector<8x256xf32>
    %c0_15 = arith.constant 0 : index
    %c0_16 = arith.constant 0 : index
    %c0_17 = arith.constant 0 : index
    %19 = vector.load %arg5[%c0_15, %c0_16, %c0_17] : memref<1x8x256xf32, #tpu.memory_space<vmem>>, vector<1x8x256xf32>
    %20 = vector.shape_cast %19 : vector<1x8x256xf32> to vector<8x256xf32>
    %21 = vector.shape_cast %18 : vector<8x256xf32> to vector<1x8x256xf32>
    tpu.vector_store %arg5[%c0_15, %c0_16, %c0_17], %21 {strides = array<i32>} : memref<1x8x256xf32, #tpu.memory_space<vmem>>, vector<1x8x256xf32>,
    return
  }
  func.func @transform_0(%arg0: i32, %arg1: i32, %arg2: i32) -> (i32, i32, i32) {
    %c0_i32 = arith.constant 0 : i32
    return %arg0, %arg1, %arg2 : i32, i32, i32
  }
  func.func @transform_1(%arg0: i32, %arg1: i32, %arg2: i32) -> (i32, i32, i32, i32) {
    %c0_i32 = arith.constant 0 : i32
    %c0_i32_0 = arith.constant 0 : i32
    %c0_i32_1 = arith.constant 0 : i32
    return %arg0, %c0_i32, %arg1, %c0_i32_0 : i32, i32, i32, i32
  }
  func.func @transform_2(%arg0: i32, %arg1: i32, %arg2: i32) -> (i32, i32, i32) {
    %c0_i32 = arith.constant 0 : i32
    return %arg0, %arg1, %arg2 : i32, i32, i32
  }
}

</mosaic_0001>

<llo_original>
// kernel: tpu_custom_call.1
$region0: #{tpu_custom_call.1}
  #allocation0 [shape = 'u32[]', space=smem, size = 0x4, offset = 0x4, fixed_abs, tag = 'smem constant byte address 0x4 - core index']
  #allocation1 [shape = 'u32[144,128]{1,0:T(1,128)}', space=vmem, size = 0x12000, scoped, tag = 'internal scratch']
  %s0 = inlined_call_operand.vmem [shape: f32[2,8,256], index: 0, kind: input, shape index: {}]
  %s1 = inlined_call_operand.vmem [shape: f32[2,4,8,1], index: 1, kind: input, shape index: {}]
  %s2 = inlined_call_operand.hbm [shape: f32[2,8,256], index: 2, kind: output, shape index: {}]
  %s3 = sld [smem:[#allocation0]]
  $region41: #{tpu_custom_call.1} parent=0
    _
  %s5 = ssub.s32 1, %s3
  %s6 = scalar_select 0, %s5, %s3
  $region1: #{tpu_custom_call.1} parent=0
    #allocation2 [shape = 'u8[16384]{0}', space=vmem, size = 0x4000, scoped, tag = 'output window, operand 0']
    #allocation3 [shape = 's32[2]{0}', space=sflag, size = 0x8, scoped, tag = 'scoped memory for tpu_custom_call.1']
    %7 = vsyncpa [#allocation3], 0
    %s8 = scalar_lea.sflag [#allocation3], 1
    %9 = vsyncpa %s8, 0
    loop: start=0, step=1, limit=4
    $region2: #{tpu_custom_call.1} parent=1 // loop_pre_header
      _
    $region3: #{tpu_custom_call.1} parent=1 // loop_header
      %s11 = sphi 0, %s15
      %p12 = scmp.ge.s32.totalorder %s11, 4
      %s18 = sphi 0, %s37
      %s19 = sphi 0, %s33
      %s20 = sphi 0, %s29
      %s21 = sphi 0, %s18
      %s22 = sphi 0, %s19
      %s23 = sphi 0, %s20
      %s24 = sphi 0, %s21
      %s25 = sphi 0, %s22
      %s26 = sphi 0, %s23
      %s44 = sphi 0, %s46
      %s47 = sphi 0, %s44
      %s48 = sphi 0, %s47
      %s64 = sphi 0, %s48
      %s72 = sphi 0, %s74
      %s75 = sphi 0, %s72
      %s76 = sphi 0, %s75
      %s92 = sphi 0, %s76
      %s102 = sphi 0, %s104
      %s105 = sphi 0, %s102
      %s106 = sphi 0, %s105
      %s122 = sphi 0, %s106
    $region4: #{tpu_custom_call.1} parent=1 // loop_header_branch
      %14 = sbr.rel (%p12) target = $region8
    $region5: #{tpu_custom_call.1} parent=1 // loop_body
      %s16 = ssub.s32 %s11, 1
      %s17 = ssub.s32 %s11, 2
      %s27 = sadd.s32 1, %s20
      %p28 = scmp.ge.s32.totalorder %s27, 1
      %s29 = scalar_select %p28, 0, %s27
      %s30 = sadd.s32 1, %s19
      %s31 = scalar_select %p28, %s30, %s19
      %p32 = scmp.ge.s32.totalorder %s31, 1
      %s33 = scalar_select %p32, 0, %s31
      %s34 = sadd.s32 1, %s18
      %s35 = scalar_select %p32, %s34, %s18
      %p36 = scmp.ge.s32.totalorder %s35, 2
      %s37 = scalar_select %p36, 0, %s35
      %s38 = ssub.s32 %s18, %s37
      %s39 = ssub.s32 %s19, %s33
      %s40 = sor.u32 %s38, %s39
      %s41 = ssub.s32 %s20, %s29
      %s42 = sor.u32 %s40, %s41
      %p43 = scmp.eq.s32.totalorder %s42, 0
      %s45 = sadd.s32 %s44, 1
      %s46 = scalar_select %p43, %s44, %s45
      %p49 = pneg %p43
      %p50 = scmp.eq.s32.totalorder %s11, 1
      %p51 = por %p49, %p50
      %p52 = scmp.ne.s32.totalorder %s44, %s47
      %p53 = scmp.eq.s32.totalorder %s11, 0
      %p54 = por %p52, %p53
      %p55 = scmp.ne.s32.totalorder %s44, %s47
      %p56 = scmp.eq.s32.totalorder %s16, 1
      %p57 = por %p55, %p56
      %p58 = scmp.ne.s32.totalorder %s47, %s48
      %p59 = scmp.eq.s32.totalorder %s16, 0
      %p60 = por %p58, %p59
      %p61 = scmp.ne.s32.totalorder %s47, %s48
      %p62 = scmp.eq.s32.totalorder %s17, 1
      %p63 = por %p61, %p62
      %p65 = scmp.ne.s32.totalorder %s48, %s64
      %p66 = scmp.eq.s32.totalorder %s17, 0
      %p67 = por %p65, %p66
      %s68 = ssub.s32 %s18, %s37
      %s69 = ssub.s32 %s19, %s33
      %s70 = sor.u32 %s68, %s69
      %p71 = scmp.eq.s32.totalorder %s70, 0
      %s73 = sadd.s32 %s72, 1
      %s74 = scalar_select %p71, %s72, %s73
      %p77 = pneg %p71
      %p78 = scmp.eq.s32.totalorder %s11, 1
      %p79 = por %p77, %p78
      %p80 = scmp.ne.s32.totalorder %s72, %s75
      %p81 = scmp.eq.s32.totalorder %s11, 0
      %p82 = por %p80, %p81
      %p83 = scmp.ne.s32.totalorder %s72, %s75
      %p84 = scmp.eq.s32.totalorder %s16, 1
      %p85 = por %p83, %p84
      %p86 = scmp.ne.s32.totalorder %s75, %s76
      %p87 = scmp.eq.s32.totalorder %s16, 0
      %p88 = por %p86, %p87
      %p89 = scmp.ne.s32.totalorder %s75, %s76
      %p90 = scmp.eq.s32.totalorder %s17, 1
      %p91 = por %p89, %p90
      %p93 = scmp.ne.s32.totalorder %s76, %s92
      %p94 = scmp.eq.s32.totalorder %s17, 0
      %p95 = por %p93, %p94
      %s96 = ssub.s32 %s18, %s37
      %s97 = ssub.s32 %s19, %s33
      %s98 = sor.u32 %s96, %s97
      %s99 = ssub.s32 %s20, %s29
      %s100 = sor.u32 %s98, %s99
      %p101 = scmp.eq.s32.totalorder %s100, 0
      %s103 = sadd.s32 %s102, 1
      %s104 = scalar_select %p101, %s102, %s103
      %p107 = pneg %p101
      %p108 = scmp.eq.s32.totalorder %s11, 1
      %p109 = por %p107, %p108
      %p110 = scmp.ne.s32.totalorder %s102, %s105
      %p111 = scmp.eq.s32.totalorder %s11, 0
      %p112 = por %p110, %p111
      %p113 = scmp.ne.s32.totalorder %s102, %s105
      %p114 = scmp.eq.s32.totalorder %s16, 1
      %p115 = por %p113, %p114
      %p116 = scmp.ne.s32.totalorder %s105, %s106
      %p117 = scmp.eq.s32.totalorder %s16, 0
      %p118 = por %p116, %p117
      %p119 = scmp.ne.s32.totalorder %s105, %s106
      %p120 = scmp.eq.s32.totalorder %s17, 1
      %p121 = por %p119, %p120
      %p123 = scmp.ne.s32.totalorder %s106, %s122
      %p124 = scmp.eq.s32.totalorder %s17, 0
      %p125 = por %p123, %p124
      %p126 = scmp.le.s32.totalorder 1, %s11
      %p127 = scmp.lt.s32.totalorder %s11, 3
      %p128 = pnand %p126, %p127
      %p129 = pneg %p128
      // Predicated region
      $region9: #{tpu_custom_call.1} parent=5 // pred_check
        _
      $region10: #{tpu_custom_call.1} parent=5 // pred_check_branch
        %131 = sbr.rel (%p128) target = $region12
      $region11: #{tpu_custom_call.1} parent=5 // pred_region
        %s132 = ssub.s32 %s11, 1
      $region12: #{tpu_custom_call.1} parent=5 // pred_fallthru
        _
      %p133 = scmp.lt.s32.totalorder %s11, 2
      // Predicated region
      $region13: #{tpu_custom_call.1} parent=5 // pred_check
        %p134 = pneg %p133
      $region14: #{tpu_custom_call.1} parent=5 // pred_check_branch
        %136 = sbr.rel (%p134) target = $region16
      $region15: #{tpu_custom_call.1} parent=5 // pred_region
        // Predicated region
        $region17: #{tpu_custom_call.1} parent=15 // pred_check
          %p137 = pneg %p54
        $region18: #{tpu_custom_call.1} parent=15 // pred_check_branch
          %139 = sbr.rel (%p137) target = $region20
        $region19: #{tpu_custom_call.1} parent=15 // pred_region
          %s140 = smul.u32 2, %s20
          %p141 = scmp.lt.s32.totalorder %s18, 1
          %s142 = scalar_select %p141, %s18, 1
          %p143 = scmp.lt.s32.totalorder %s19, 0
          %s144 = scalar_select %p143, %s19, 0
          %p145 = scmp.lt.s32.totalorder %s140, 1
          %s146 = scalar_select %p145, %s140, 1
          %s147 = smul.addr %s144, 2
          %s148 = sadd.s32 %s146, %s147
          %s149 = smul.addr %s142, 2
          %s150 = sadd.s32 %s148, %s149
          %s151 = smul.addr %s150, 8
          %s152 = scalar_lea.vmem %s0, %s151
          %s153 = smul.u32 2, %s20
        $region20: #{tpu_custom_call.1} parent=15 // pred_fallthru
          _
        // Predicated region
        $region21: #{tpu_custom_call.1} parent=15 // pred_check
          %p154 = pneg %p82
        $region22: #{tpu_custom_call.1} parent=15 // pred_check_branch
          %156 = sbr.rel (%p154) target = $region24
        $region23: #{tpu_custom_call.1} parent=15 // pred_region
          %p157 = scmp.lt.s32.totalorder %s18, 1
          %s158 = scalar_select %p157, %s18, 1
          %p159 = scmp.lt.s32.totalorder %s19, 0
          %s160 = scalar_select %p159, %s19, 0
          %s161 = smul.addr %s158, 4
          %s162 = sadd.s32 %s160, %s161
          %s163 = smul.addr %s162, 8
          %s164 = scalar_lea.vmem %s1, %s163
        $region24: #{tpu_custom_call.1} parent=15 // pred_fallthru
          _
      $region16: #{tpu_custom_call.1} parent=5 // pred_fallthru
        _
      %p165 = scmp.le.s32.totalorder 1, %s11
      %p166 = scmp.lt.s32.totalorder %s11, 3
      %p167 = pnand %p165, %p166
      %p168 = pneg %p167
      // Predicated region
      $region25: #{tpu_custom_call.1} parent=5 // pred_check
        _
      $region26: #{tpu_custom_call.1} parent=5 // pred_check_branch
        %170 = sbr.rel (%p167) target = $region28
      $region27: #{tpu_custom_call.1} parent=5 // pred_region
        %s171 = ssub.s32 %s11, 1
        %s172 = smul.u32 2, %s23
        %p173 = scmp.lt.s32.totalorder %s21, 1
        %s174 = scalar_select %p173, %s21, 1
        %p175 = scmp.lt.s32.totalorder %s22, 0
        %s176 = scalar_select %p175, %s22, 0
        %p177 = scmp.lt.s32.totalorder %s172, 1
        %s178 = scalar_select %p177, %s172, 1
        %s179 = smul.addr %s176, 2
        %s180 = sadd.s32 %s178, %s179
        %s181 = smul.addr %s174, 2
        %s182 = sadd.s32 %s180, %s181
        %s183 = smul.addr %s182, 8
        %s184 = scalar_lea.vmem %s0, %s183
        %p185 = pneg %p60
        %p186 = pneg %p57
        %p187 = scmp.lt.s32.totalorder %s21, 1
        %s188 = scalar_select %p187, %s21, 1
        %p189 = scmp.lt.s32.totalorder %s22, 0
        %s190 = scalar_select %p189, %s22, 0
        %s191 = smul.addr %s188, 4
        %s192 = sadd.s32 %s190, %s191
        %s193 = smul.addr %s192, 8
        %s194 = scalar_lea.vmem %s1, %s193
        %p195 = pneg %p88
        %p196 = pneg %p85
        %p197 = pneg %p118
        %p198 = pneg %p115
        %s199 = sand.u32 %s105, 1
        %s200 = scalar_lea.sflag [#allocation3], %s199
        %s201 = sand.u32 %s105, 1
        %s202 = smul.addr %s201, 16
        %s203 = scalar_lea.vmem [#allocation2], %s202
        %s204 = smul.u32 2, %s23
        %p205 = scmp.lt.s32.totalorder %s21, 1
        %s206 = scalar_select %p205, %s21, 1
        %p207 = scmp.lt.s32.totalorder %s22, 0
        %s208 = scalar_select %p207, %s22, 0
        %p209 = scmp.lt.s32.totalorder %s204, 1
        %s210 = scalar_select %p209, %s204, 1
        %s211 = smul.addr %s208, 2
        %s212 = sadd.s32 %s210, %s211
        %s213 = smul.addr %s206, 2
        %s214 = sadd.s32 %s212, %s213
        %s215 = smul.addr %s214, 8
        %s216 = scalar_lea.vmem %s0, %s215
        %s217 = smul.u32 2, %s23
        %p218 = scmp.lt.s32.totalorder %s21, 1
        %s219 = scalar_select %p218, %s21, 1
        %p220 = scmp.lt.s32.totalorder %s22, 0
        %s221 = scalar_select %p220, %s22, 0
        %s222 = smul.addr %s219, 4
        %s223 = sadd.s32 %s221, %s222
        %s224 = smul.addr %s223, 8
        %s225 = scalar_lea.vmem %s1, %s224
        %s226 = smul.u32 2, %s23
        %v227 = vld [vmem:[%s216] sm:$0xff]
        %v228 = vld [vmem:[%s216 + $0x8] sm:$0xff]
        %v229 = vld [vmem:[%s225] sm:$0xff]
        %s230 = scalar_lea.vmem %s225, 16
        %v231 = vld [vmem:[%s230] sm:$0xff]
        %233 = vset.pattern.permute.xlu0 0
        %234 = vperm.xlu0 %233, %v229
        %v235 = vpop.permute.xlu0 %234
        %v237 = vmul.f32 %v227, %v235
        %v238 = vmul.f32 %v228, %v235
        %240 = vset.pattern.permute.xlu0 0
        %241 = vperm.xlu0 %240, %v231
        %v242 = vpop.permute.xlu0 %241
        %v244 = vadd.f32 %v237, %v242
        %v245 = vadd.f32 %v238, %v242
        %s246 = scalar_lea.vmem %s225, 8
        %v247 = vld [vmem:[%s246] sm:$0xff]
        %s248 = scalar_lea.vmem %s225, 24
        %v249 = vld [vmem:[%s248] sm:$0xff]
        %251 = vset.pattern.permute.xlu0 0
        %252 = vperm.xlu0 %251, %v247
        %v253 = vpop.permute.xlu0 %252
        %v255 = vmul.f32 %v227, %v253
        %v256 = vmul.f32 %v228, %v253
        %258 = vset.pattern.permute.xlu0 0
        %259 = vperm.xlu0 %258, %v249
        %v260 = vpop.permute.xlu0 %259
        %v262 = vadd.f32 %v255, %v260
        %v263 = vadd.f32 %v256, %v260
        %v264 = vmax.f32 %v244, %v262
        %v265 = vmax.f32 %v245, %v263
        %266 = vst [vmem:[%s203] sm:$0xff] %v264
        %267 = vst [vmem:[%s203 + $0x8] sm:$0xff] %v265
        %s268 = sand.u32 %s105, 1
        %s269 = scalar_lea.sflag [#allocation3], %s268
        %s270 = sand.u32 %s105, 1
        %s271 = smul.addr %s270, 16
        %s272 = scalar_lea.vmem [#allocation2], %s271
        // Predicated region
        $region29: #{tpu_custom_call.1} parent=27 // pred_check
          %p273 = pneg %p115
        $region30: #{tpu_custom_call.1} parent=27 // pred_check_branch
          %275 = sbr.rel (%p273) target = $region32
        $region31: #{tpu_custom_call.1} parent=27 // pred_region
          %s276 = smul.u32 2, %s23
          %s278 = ssub.s32 256, 256
          %279 = vsyncadd %s269, %s278
          %s280 = smul.addr %s22, 2
          %s281 = sadd.s32 %s276, %s280
          %s282 = smul.addr %s21, 2
          %s283 = sadd.s32 %s281, %s282
          %s284 = smul.addr %s283, 128
          %s285 = scalar_lea.hbm %s2, %s284
          %s287 = sshll.u32 %s272, 4
          %s288 = int_to_ptr.vmem [resolvable:$true] %s287
          %290 = dma.vmem_to_hbm [thread:$0]  %s288, 256, %s285, %s269
        $region32: #{tpu_custom_call.1} parent=27 // pred_fallthru
          _
      $region28: #{tpu_custom_call.1} parent=5 // pred_fallthru
        _
      %p291 = scmp.le.s32.totalorder 2, %s11
      // Predicated region
      $region33: #{tpu_custom_call.1} parent=5 // pred_check
        %p292 = pneg %p291
      $region34: #{tpu_custom_call.1} parent=5 // pred_check_branch
        %294 = sbr.rel (%p292) target = $region36
      $region35: #{tpu_custom_call.1} parent=5 // pred_region
        %s295 = ssub.s32 %s11, 2
        // Predicated region
        $region37: #{tpu_custom_call.1} parent=35 // pred_check
          %p296 = pneg %p121
        $region38: #{tpu_custom_call.1} parent=35 // pred_check_branch
          %298 = sbr.rel (%p296) target = $region40
        $region39: #{tpu_custom_call.1} parent=35 // pred_region
          %s299 = sand.u32 %s106, 1
          %s300 = scalar_lea.sflag [#allocation3], %s299
          %s301 = sand.u32 %s106, 1
          %s302 = smul.addr %s301, 16
          %s303 = scalar_lea.vmem [#allocation2], %s302
          %304 = dma.done %s300, 256
        $region40: #{tpu_custom_call.1} parent=35 // pred_fallthru
          _
      $region36: #{tpu_custom_call.1} parent=5 // pred_fallthru
        _
    $region6: #{tpu_custom_call.1} parent=1 // loop_footer
      %s15 = sadd.s32 1, %s11
    $region7: #{tpu_custom_call.1} parent=1 // loop_footer_branch
      %10 = sbr.rel target = $region3
    $region8: #{tpu_custom_call.1} parent=1 // loop_exit
      _
    %305 = vsyncpa [#allocation3], 1
    %s306 = scalar_lea.sflag [#allocation3], 1
    %307 = vsyncpa %s306, 1

</llo_original>
